<compile_context>
chip_gen: v7x
topology: tpu7x:2x2x1
jax: 0.10.0
libtpu: 0.0.40
codegen_flags: <defaults>
</compile_context>

<pallas_src>
import functools
import math

import jax
import jax.numpy as jnp
from jax import lax
from jax.experimental import pallas as pl
from jax.experimental.pallas import tpu as pltpu


def _round_up(x, m):
    return (x + m - 1) // m * m


def _attn_kernel(q_ref, k_ref, v_ref, vlen_ref, o_ref,
                 m_sc, l_sc, acc_sc, *, scale, k_tile, needs_mask):
    kv = pl.program_id(1)

    @pl.when(kv == 0)
    def _init():
        m_sc[...] = jnp.full_like(m_sc, -jnp.inf)
        l_sc[...] = jnp.zeros_like(l_sc)
        acc_sc[...] = jnp.zeros_like(acc_sc)

    # Native-dtype operands straight into the MXU; scale folded into q.
    q = q_ref[...] * scale                                    # (BB, Q, Dp)
    k = k_ref[...]                                            # (BB, TK, Dp)
    v = v_ref[...]                                            # (BB, TK, Vp)

    # scores = q @ k^T without materializing a transpose (contract last dims,
    # batch dim 0); f32 accumulation on the MXU.
    s = lax.dot_general(q, k, (((2,), (2,)), ((0,), (0,))),
                        preferred_element_type=jnp.float32)   # (BB, Q, TK)

    if needs_mask:
        # sequence mask (PyTorch masked_softmax uses -1e6 for masked positions)
        col = kv * k_tile + lax.broadcasted_iota(jnp.int32, s.shape, 2)
        s = jnp.where(col < vlen_ref[...], s, jnp.float32(-1000000.0))

    # online (flash-style) softmax across K tiles
    m_prev = m_sc[...]
    m_new = jnp.maximum(m_prev, jnp.max(s, axis=-1, keepdims=True))
    alpha = jnp.exp(m_prev - m_new)
    p = jnp.exp(s - m_new)
    l_sc[...] = alpha * l_sc[...] + jnp.sum(p, axis=-1, keepdims=True)
    pv = lax.dot_general(p.astype(v.dtype), v, (((2,), (1,)), ((0,), (0,))),
                         preferred_element_type=jnp.float32)  # (BB, Q, Vp)
    acc_sc[...] = alpha * acc_sc[...] + pv
    m_sc[...] = m_new

    @pl.when(kv == pl.num_programs(1) - 1)
    def _finalize():
        inv_l = pl.reciprocal(l_sc[...], approx=True)         # EUP slot
        o_ref[...] = (acc_sc[...] * inv_l).astype(o_ref.dtype)


def dot_product_attention(queries, keys, values, valid_lens=None,
                          *, k_tile_max=512,
                          vmem_block_budget=6 * 1024 * 1024):
    B, Q, D = queries.shape
    _, K, _ = keys.shape
    _, _, V = values.shape

    # per-(batch, query) valid lengths (None / 1-D / 2-D forms of masked_softmax)
    if valid_lens is None:
        vlen = jnp.full((B, Q), K, dtype=jnp.int32)
    elif valid_lens.ndim == 1:
        vlen = jnp.broadcast_to(valid_lens.astype(jnp.int32)[:, None], (B, Q))
    else:
        vlen = valid_lens.astype(jnp.int32).reshape(B, Q)
    vlen = vlen.reshape(B, Q, 1)

    # lane-dense feature dims (multiples of 128)
    Dp = _round_up(D, 128)
    Vp = _round_up(V, 128)

    # K tiling for the online softmax
    if K <= k_tile_max:
        TK, Kp = K, K
    else:
        TK = k_tile_max
        Kp = _round_up(K, TK)

    needs_mask = (valid_lens is not None) or (Kp != K)

    q = jnp.pad(queries, ((0, 0), (0, 0), (0, Dp - D)))
    k = jnp.pad(keys, ((0, 0), (0, Kp - K), (0, Dp - D)))
    v = jnp.pad(values, ((0, 0), (0, Kp - K), (0, Vp - V)))

    # pick how many batches to fold into one grid step (amortize step cost)
    itemsize = queries.dtype.itemsize

    def footprint(bb):
        blocks = bb * (Q * Dp + TK * Dp + TK * Vp + Q * Vp) * itemsize
        scratch = bb * (Q * Vp + 2 * Q) * 4
        return 2 * blocks + scratch       # inputs/outputs are double-buffered

    BB = 1
    for cand in range(B, 0, -1):
        if B % cand == 0 and footprint(cand) <= vmem_block_budget:
            BB = cand
            break

    grid = (B // BB, Kp // TK)
    kernel = functools.partial(_attn_kernel,
                               scale=1.0 / math.sqrt(D), k_tile=TK,
                               needs_mask=needs_mask)

    out = pl.pallas_call(
        kernel,
        out_shape=jax.ShapeDtypeStruct((B, Q, Vp), queries.dtype),
        grid_spec=pltpu.PrefetchScalarGridSpec(
            num_scalar_prefetch=0,
            grid=grid,
            in_specs=[
                pl.BlockSpec((BB, Q, Dp), lambda b, kv: (b, 0, 0)),
                pl.BlockSpec((BB, TK, Dp), lambda b, kv: (b, kv, 0)),
                pl.BlockSpec((BB, TK, Vp), lambda b, kv: (b, kv, 0)),
                pl.BlockSpec((BB, Q, 1), lambda b, kv: (b, 0, 0)),
            ],
            out_specs=pl.BlockSpec((BB, Q, Vp), lambda b, kv: (b, 0, 0)),
            scratch_shapes=[
                pltpu.VMEM((BB, Q, 1), jnp.float32),    # running max
                pltpu.VMEM((BB, Q, 1), jnp.float32),    # running denominator
                pltpu.VMEM((BB, Q, Vp), jnp.float32),   # running accumulator
            ],
        ),
        compiler_params=pltpu.CompilerParams(
            dimension_semantics=("parallel", "arbitrary"),
        ),
    )(q, k, v, vlen)

    return out[..., :V] if Vp != V else out


def _reference(queries, keys, values, valid_lens=None):
    d = queries.shape[-1]
    scores = jnp.einsum("bqd,bkd->bqk", queries, keys) / math.sqrt(d)
    if valid_lens is not None:
        col = jnp.arange(scores.shape[-1])[None, None, :]
        if valid_lens.ndim == 1:
            mask = col < valid_lens[:, None, None]
        else:
            mask = col < valid_lens[:, :, None]
        scores = jnp.where(mask, scores, -1000000.0)
    w = jax.nn.softmax(scores, axis=-1)
    return jnp.einsum("bqk,bkv->bqv", w, values)


if __name__ == "__main__":
    key = jax.random.PRNGKey(0)
    kq, kk, kv = jax.random.split(key, 3)

    B, Q, K, D, V = 2, 8, 8, 32, 32
    queries = jax.random.normal(kq, (B, Q, D), dtype=jnp.float32)
    keys = jax.random.normal(kk, (B, K, D), dtype=jnp.float32)
    values = jax.random.normal(kv, (B, K, V), dtype=jnp.float32)
    valid_lens = jnp.array([3, 6], dtype=jnp.int32)

    out = dot_product_attention(queries, keys, values, valid_lens)
    out = jax.block_until_ready(out)
    ref = _reference(queries, keys, values, valid_lens)
    assert out.shape == (B, Q, V)
    assert jnp.allclose(out, ref, atol=2e-3, rtol=2e-3), "mismatch vs reference"

    # no-mask path
    out2 = jax.block_until_ready(dot_product_attention(queries, keys, values, None))
    ref2 = _reference(queries, keys, values, None)
    assert jnp.allclose(out2, ref2, atol=2e-3, rtol=2e-3), "mismatch (no mask)"

    print("KERNEL_OK")
</pallas_src>

<mosaic_0001>
module attributes {stable_mosaic.version = 11 : i64} {
  func.func @_attn_kernel(%arg0: i32, %arg1: i32, %arg2: memref<2x8x128xf32, #tpu.memory_space<vmem>>, %arg3: memref<2x8x128xf32, #tpu.memory_space<vmem>>, %arg4: memref<2x8x128xf32, #tpu.memory_space<vmem>>, %arg5: memref<2x8x1xi32, #tpu.memory_space<vmem>>, %arg6: memref<2x8x128xf32, #tpu.memory_space<vmem>>, %arg7: memref<2x8x1xf32, #tpu.memory_space<vmem>>, %arg8: memref<2x8x1xf32, #tpu.memory_space<vmem>>, %arg9: memref<2x8x128xf32, #tpu.memory_space<vmem>>) attributes {dimension_semantics = [#tpu.dimension_semantics<parallel>, #tpu.dimension_semantics<arbitrary>], iteration_bounds = array<i64: 1, 1>, scalar_prefetch = 0 : i64, scratch_operands = 3 : i64, tpu.core_type = #tpu.core_type<tc>, window_params = [{transform_indices = @transform_0, window_bounds = array<i64: 2, 8, 128>}, {transform_indices = @transform_1, window_bounds = array<i64: 2, 8, 128>}, {transform_indices = @transform_2, window_bounds = array<i64: 2, 8, 128>}, {transform_indices = @transform_3, window_bounds = array<i64: 2, 8, 1>}, {transform_indices = @transform_4, window_bounds = array<i64: 2, 8, 128>}]} {
    %c0_i32 = arith.constant 0 : i32
    %0 = arith.cmpi eq, %arg1, %c0_i32 : i32
    %1 = arith.extui %0 : i1 to i32
    %c0_i32_0 = arith.constant 0 : i32
    %2 = arith.cmpi ne, %1, %c0_i32_0 : i32
    scf.if %2 {
      %cst_37 = arith.constant 0xFF800000 : f32
      %43 = vector.broadcast %cst_37 : f32 to vector<2x8x1xf32>
      %c0_38 = arith.constant 0 : index
      %c0_39 = arith.constant 0 : index
      %c0_40 = arith.constant 0 : index
      %44 = vector.load %arg7[%c0_38, %c0_39, %c0_40] : memref<2x8x1xf32, #tpu.memory_space<vmem>>, vector<2x8x1xf32>
      tpu.vector_store %arg7[%c0_38, %c0_39, %c0_40], %43 {strides = array<i32>} : memref<2x8x1xf32, #tpu.memory_space<vmem>>, vector<2x8x1xf32>,
      %cst_41 = arith.constant 0.000000e+00 : f32
      %45 = vector.broadcast %cst_41 : f32 to vector<2x8x1xf32>
      %c0_42 = arith.constant 0 : index
      %c0_43 = arith.constant 0 : index
      %c0_44 = arith.constant 0 : index
      %46 = vector.load %arg8[%c0_42, %c0_43, %c0_44] : memref<2x8x1xf32, #tpu.memory_space<vmem>>, vector<2x8x1xf32>
      tpu.vector_store %arg8[%c0_42, %c0_43, %c0_44], %45 {strides = array<i32>} : memref<2x8x1xf32, #tpu.memory_space<vmem>>, vector<2x8x1xf32>,
      %cst_45 = arith.constant 0.000000e+00 : f32
      %47 = vector.broadcast %cst_45 : f32 to vector<2x8x128xf32>
      %c0_46 = arith.constant 0 : index
      %c0_47 = arith.constant 0 : index
      %c0_48 = arith.constant 0 : index
      %48 = vector.load %arg9[%c0_46, %c0_47, %c0_48] : memref<2x8x128xf32, #tpu.memory_space<vmem>>, vector<2x8x128xf32>
      tpu.vector_store %arg9[%c0_46, %c0_47, %c0_48], %47 {strides = array<i32>} : memref<2x8x128xf32, #tpu.memory_space<vmem>>, vector<2x8x128xf32>,
    } else {
    }
    %c0 = arith.constant 0 : index
    %c0_1 = arith.constant 0 : index
    %c0_2 = arith.constant 0 : index
    %3 = vector.load %arg2[%c0, %c0_1, %c0_2] : memref<2x8x128xf32, #tpu.memory_space<vmem>>, vector<2x8x128xf32>
    %cst = arith.constant 0.176776692 : f32
    %4 = vector.broadcast %cst : f32 to vector<2x8x128xf32>
    %5 = arith.mulf %3, %4 : vector<2x8x128xf32>
    %c0_3 = arith.constant 0 : index
    %c0_4 = arith.constant 0 : index
    %c0_5 = arith.constant 0 : index
    %6 = vector.load %arg3[%c0_3, %c0_4, %c0_5] : memref<2x8x128xf32, #tpu.memory_space<vmem>>, vector<2x8x128xf32>
    %c0_6 = arith.constant 0 : index
    %c0_7 = arith.constant 0 : index
    %c0_8 = arith.constant 0 : index
    %7 = vector.load %arg4[%c0_6, %c0_7, %c0_8] : memref<2x8x128xf32, #tpu.memory_space<vmem>>, vector<2x8x128xf32>
    %cst_9 = arith.constant dense<0.000000e+00> : vector<2x8x8xf32>
    %8 = tpu.matmul %5, %6, %cst_9 {dimension_numbers = #tpu.dot_dimension_numbers<[2], [2], [1], [1], [0, 0, 0, 1, 1, 1], [0], [0]>} : vector<2x8x128xf32>, vector<2x8x128xf32>, vector<2x8x8xf32> -> vector<2x8x8xf32>
    %c8_i32 = arith.constant 8 : i32
    %9 = arith.muli %arg1, %c8_i32 : i32
    %10 = tpu.iota {dimensions = array<i32: 2>} : vector<2x8x8xi32>
    %11 = vector.broadcast %9 : i32 to vector<2x8x8xi32>
    %12 = arith.addi %11, %10 : vector<2x8x8xi32>
    %c0_10 = arith.constant 0 : index
    %c0_11 = arith.constant 0 : index
    %c0_12 = arith.constant 0 : index
    %13 = vector.load %arg5[%c0_10, %c0_11, %c0_12] : memref<2x8x1xi32, #tpu.memory_space<vmem>>, vector<2x8x1xi32>
    %14 = vector.broadcast %13 : vector<2x8x1xi32> to vector<2x8x8xi32>
    %15 = arith.cmpi slt, %12, %14 : vector<2x8x8xi32>
    %cst_13 = arith.constant -1.000000e+06 : f32
    %16 = vector.broadcast %cst_13 : f32 to vector<2x8x8xf32>
    %17 = arith.select %15, %8, %16 : vector<2x8x8xi1>, vector<2x8x8xf32>
    %c0_14 = arith.constant 0 : index
    %c0_15 = arith.constant 0 : index
    %c0_16 = arith.constant 0 : index
    %18 = vector.load %arg7[%c0_14, %c0_15, %c0_16] : memref<2x8x1xf32, #tpu.memory_space<vmem>>, vector<2x8x1xf32>
    %cst_17 = arith.constant dense<0xFF800000> : vector<2x8xf32>
    %19 = vector.multi_reduction <maximumf>, %17, %cst_17 [2] : vector<2x8x8xf32> to vector<2x8xf32>
    %20 = vector.shape_cast %19 : vector<2x8xf32> to vector<2x8x1xf32>
    %21 = arith.maximumf %18, %20 : vector<2x8x1xf32>
    %22 = arith.subf %18, %21 : vector<2x8x1xf32>
    %23 = math.exp %22 : vector<2x8x1xf32>
    %24 = vector.broadcast %21 : vector<2x8x1xf32> to vector<2x8x8xf32>
    %25 = arith.subf %17, %24 : vector<2x8x8xf32>
    %26 = math.exp %25 : vector<2x8x8xf32>
    %c0_18 = arith.constant 0 : index
    %c0_19 = arith.constant 0 : index
    %c0_20 = arith.constant 0 : index
    %27 = vector.load %arg8[%c0_18, %c0_19, %c0_20] : memref<2x8x1xf32, #tpu.memory_space<vmem>>, vector<2x8x1xf32>
    %28 = arith.mulf %23, %27 : vector<2x8x1xf32>
    %cst_21 = arith.constant dense<0.000000e+00> : vector<2x8xf32>
    %29 = vector.multi_reduction <add>, %26, %cst_21 [2] : vector<2x8x8xf32> to vector<2x8xf32>
    %30 = vector.shape_cast %29 : vector<2x8xf32> to vector<2x8x1xf32>
    %31 = arith.addf %28, %30 : vector<2x8x1xf32>
    %c0_22 = arith.constant 0 : index
    %c0_23 = arith.constant 0 : index
    %c0_24 = arith.constant 0 : index
    %32 = vector.load %arg8[%c0_22, %c0_23, %c0_24] : memref<2x8x1xf32, #tpu.memory_space<vmem>>, vector<2x8x1xf32>
    tpu.vector_store %arg8[%c0_22, %c0_23, %c0_24], %31 {strides = array<i32>} : memref<2x8x1xf32, #tpu.memory_space<vmem>>, vector<2x8x1xf32>,
    %cst_25 = arith.constant dense<0.000000e+00> : vector<2x8x128xf32>
    %33 = tpu.matmul %26, %7, %cst_25 {dimension_numbers = #tpu.dot_dimension_numbers<[2], [1], [1], [2], [0, 0, 0, 1, 1, 2], [0], [0]>} : vector<2x8x8xf32>, vector<2x8x128xf32>, vector<2x8x128xf32> -> vector<2x8x128xf32>
    %c0_26 = arith.constant 0 : index
    %c0_27 = arith.constant 0 : index
    %c0_28 = arith.constant 0 : index
    %34 = vector.load %arg9[%c0_26, %c0_27, %c0_28] : memref<2x8x128xf32, #tpu.memory_space<vmem>>, vector<2x8x128xf32>
    %35 = vector.broadcast %23 : vector<2x8x1xf32> to vector<2x8x128xf32>
    %36 = arith.mulf %35, %34 : vector<2x8x128xf32>
    %37 = arith.addf %36, %33 : vector<2x8x128xf32>
    %c0_29 = arith.constant 0 : index
    %c0_30 = arith.constant 0 : index
    %c0_31 = arith.constant 0 : index
    %38 = vector.load %arg9[%c0_29, %c0_30, %c0_31] : memref<2x8x128xf32, #tpu.memory_space<vmem>>, vector<2x8x128xf32>
    tpu.vector_store %arg9[%c0_29, %c0_30, %c0_31], %37 {strides = array<i32>} : memref<2x8x128xf32, #tpu.memory_space<vmem>>, vector<2x8x128xf32>,
    %c0_32 = arith.constant 0 : index
    %c0_33 = arith.constant 0 : index
    %c0_34 = arith.constant 0 : index
    %39 = vector.load %arg7[%c0_32, %c0_33, %c0_34] : memref<2x8x1xf32, #tpu.memory_space<vmem>>, vector<2x8x1xf32>
    tpu.vector_store %arg7[%c0_32, %c0_33, %c0_34], %21 {strides = array<i32>} : memref<2x8x1xf32, #tpu.memory_space<vmem>>, vector<2x8x1xf32>,
    %c0_i32_35 = arith.constant 0 : i32
    %40 = arith.cmpi eq, %arg1, %c0_i32_35 : i32
    %41 = arith.extui %40 : i1 to i32
    %c0_i32_36 = arith.constant 0 : i32
    %42 = arith.cmpi ne, %41, %c0_i32_36 : i32
    scf.if %42 {
      %c0_37 = arith.constant 0 : index
      %c0_38 = arith.constant 0 : index
      %c0_39 = arith.constant 0 : index
      %43 = vector.load %arg8[%c0_37, %c0_38, %c0_39] : memref<2x8x1xf32, #tpu.memory_space<vmem>>, vector<2x8x1xf32>
      %44 = tpu.reciprocal %43 {approx = true} : vector<2x8x1xf32> -> vector<2x8x1xf32>
      %c0_40 = arith.constant 0 : index
      %c0_41 = arith.constant 0 : index
      %c0_42 = arith.constant 0 : index
      %45 = vector.load %arg9[%c0_40, %c0_41, %c0_42] : memref<2x8x128xf32, #tpu.memory_space<vmem>>, vector<2x8x128xf32>
      %46 = vector.broadcast %44 : vector<2x8x1xf32> to vector<2x8x128xf32>
      %47 = arith.mulf %45, %46 : vector<2x8x128xf32>
      %c0_43 = arith.constant 0 : index
      %c0_44 = arith.constant 0 : index
      %c0_45 = arith.constant 0 : index
      %48 = vector.load %arg6[%c0_43, %c0_44, %c0_45] : memref<2x8x128xf32, #tpu.memory_space<vmem>>, vector<2x8x128xf32>
      tpu.vector_store %arg6[%c0_43, %c0_44, %c0_45], %47 {strides = array<i32>} : memref<2x8x128xf32, #tpu.memory_space<vmem>>, vector<2x8x128xf32>,
    } else {
    }
    return
  }
  func.func @transform_0(%arg0: i32, %arg1: i32) -> (i32, i32, i32) {
    %c0_i32 = arith.constant 0 : i32
    %c0_i32_0 = arith.constant 0 : i32
    %c0_i32_1 = arith.constant 0 : i32
    return %arg0, %c0_i32, %c0_i32_0 : i32, i32, i32
  }
  func.func @transform_1(%arg0: i32, %arg1: i32) -> (i32, i32, i32) {
    %c0_i32 = arith.constant 0 : i32
    %c0_i32_0 = arith.constant 0 : i32
    return %arg0, %arg1, %c0_i32 : i32, i32, i32
  }
  func.func @transform_2(%arg0: i32, %arg1: i32) -> (i32, i32, i32) {
    %c0_i32 = arith.constant 0 : i32
    %c0_i32_0 = arith.constant 0 : i32
    return %arg0, %arg1, %c0_i32 : i32, i32, i32
  }
  func.func @transform_3(%arg0: i32, %arg1: i32) -> (i32, i32, i32) {
    %c0_i32 = arith.constant 0 : i32
    %c0_i32_0 = arith.constant 0 : i32
    %c0_i32_1 = arith.constant 0 : i32
    return %arg0, %c0_i32, %c0_i32_0 : i32, i32, i32
  }
  func.func @transform_4(%arg0: i32, %arg1: i32) -> (i32, i32, i32) {
    %c0_i32 = arith.constant 0 : i32
    %c0_i32_0 = arith.constant 0 : i32
    %c0_i32_1 = arith.constant 0 : i32
    return %arg0, %c0_i32, %c0_i32_0 : i32, i32, i32
  }
}

</mosaic_0001>

<llo_original>
// kernel: tpu_custom_call.1
$region0: #{tpu_custom_call.1}
  #allocation0 [shape = 'u32[]', space=smem, size = 0x4, offset = 0x4, fixed_abs, tag = 'smem constant byte address 0x4 - core index']
  #allocation1 [shape = 'u32[144,128]{1,0:T(1,128)}', space=vmem, size = 0x12000, scoped, tag = 'internal scratch']
  #allocation2 [shape = 'f32[2,8,1]{2,1,0:T(8,128)}', space=vmem, size = 0x2000, scoped, tag = 'scratch operand']
  #allocation3 [shape = 'f32[2,8,1]{2,1,0:T(8,128)}', space=vmem, size = 0x2000, scoped, tag = 'scratch operand']
  #allocation4 [shape = 'f32[2,8,128]{2,1,0:T(8,128)}', space=vmem, size = 0x2000, scoped, tag = 'scratch operand']
  %s0 = inlined_call_operand.vmem [shape: f32[2,8,128], index: 0, kind: input, shape index: {}]
  %s1 = inlined_call_operand.hbm [shape: f32[2,8,128], index: 1, kind: input, shape index: {}]
  %s2 = inlined_call_operand.hbm [shape: f32[2,8,128], index: 2, kind: input, shape index: {}]
  %s3 = inlined_call_operand.vmem [shape: s32[2,8,1], index: 3, kind: input, shape index: {}]
  %s4 = inlined_call_operand.hbm [shape: f32[2,8,128], index: 4, kind: output, shape index: {}]
  %s5 = sld [smem:[#allocation0]]
  $region42: #{tpu_custom_call.1} parent=0
    _
  %s7 = ssub.s32 1, %s5
  %s8 = scalar_select 0, %s7, %s5
  $region1: #{tpu_custom_call.1} parent=0
    #allocation5 [shape = 'u8[8192]{0}', space=vmem, size = 0x2000, scoped, tag = 'input window, operand 1, single buffered']
    #allocation6 [shape = 's32[1]{0}', space=sflag, size = 0x4, scoped, tag = 'scoped memory for tpu_custom_call.1']
    #allocation7 [shape = 's32[1]{0}', space=sflag, size = 0x4, scoped, tag = 'scoped memory for tpu_custom_call.1']
    #allocation8 [shape = 'u8[8192]{0}', space=vmem, size = 0x2000, scoped, tag = 'input window, operand 2, single buffered']
    #allocation9 [shape = 's32[1]{0}', space=sflag, size = 0x4, scoped, tag = 'scoped memory for tpu_custom_call.1']
    #allocation10 [shape = 'u8[8192]{0}', space=vmem, size = 0x2000, scoped, tag = 'output window, operand 0, single buffered']
    %9 = vsyncpa [#allocation6], 0
    %10 = vsyncpa [#allocation9], 0
    %11 = vsyncpa [#allocation7], 0
    // Predicated region
    $region2: #{tpu_custom_call.1} parent=1 // pred_check
      _
    $region3: #{tpu_custom_call.1} parent=1 // pred_check_branch
      %13 = sbr.rel (0) target = $region5
    $region4: #{tpu_custom_call.1} parent=1 // pred_region
      _
    $region5: #{tpu_custom_call.1} parent=1 // pred_fallthru
      _
    // Predicated region
    $region6: #{tpu_custom_call.1} parent=1 // pred_check
      _
    $region7: #{tpu_custom_call.1} parent=1 // pred_check_branch
      %15 = sbr.rel (0) target = $region9
    $region8: #{tpu_custom_call.1} parent=1 // pred_region
      %s17 = ssub.s32 256, 256
      %18 = vsyncadd [#allocation6], %s17
      %s19 = sshll.u32 [#allocation5], 4
      %s20 = int_to_ptr.vmem [resolvable:$true] %s19
      %25 = dma.hbm_to_vmem [thread:$0]  %s1, 256, %s20, [#allocation6], 128, 128, 8
    $region9: #{tpu_custom_call.1} parent=1 // pred_fallthru
      _
    // Predicated region
    $region10: #{tpu_custom_call.1} parent=1 // pred_check
      _
    $region11: #{tpu_custom_call.1} parent=1 // pred_check_branch
      %27 = sbr.rel (0) target = $region13
    $region12: #{tpu_custom_call.1} parent=1 // pred_region
      %s29 = ssub.s32 256, 256
      %30 = vsyncadd [#allocation9], %s29
      %s31 = sshll.u32 [#allocation8], 4
      %s32 = int_to_ptr.vmem [resolvable:$true] %s31
      %37 = dma.hbm_to_vmem [thread:$0]  %s2, 256, %s32, [#allocation9], 128, 128, 8
    $region13: #{tpu_custom_call.1} parent=1 // pred_fallthru
      _
    // Predicated region
    $region14: #{tpu_custom_call.1} parent=1 // pred_check
      _
    $region15: #{tpu_custom_call.1} parent=1 // pred_check_branch
      %39 = sbr.rel (0) target = $region17
    $region16: #{tpu_custom_call.1} parent=1 // pred_region
      _
    $region17: #{tpu_custom_call.1} parent=1 // pred_fallthru
      _
    // Predicated region
    $region18: #{tpu_custom_call.1} parent=1 // pred_check
      _
    $region19: #{tpu_custom_call.1} parent=1 // pred_check_branch
      %41 = sbr.rel (0) target = $region21
    $region20: #{tpu_custom_call.1} parent=1 // pred_region
      %42 = dma.done [#allocation6], 256
    $region21: #{tpu_custom_call.1} parent=1 // pred_fallthru
      _
    // Predicated region
    $region22: #{tpu_custom_call.1} parent=1 // pred_check
      _
    $region23: #{tpu_custom_call.1} parent=1 // pred_check_branch
      %44 = sbr.rel (0) target = $region25
    $region24: #{tpu_custom_call.1} parent=1 // pred_region
      %45 = dma.done [#allocation9], 256
    $region25: #{tpu_custom_call.1} parent=1 // pred_fallthru
      _
    %p46 = scmp.eq.s32.totalorder 0, 0
    // Predicated region
    $region26: #{tpu_custom_call.1} parent=1 // pred_check
      %p47 = pneg %p46
    $region27: #{tpu_custom_call.1} parent=1 // pred_check_branch
      %49 = sbr.rel (%p47) target = $region29
    $region28: #{tpu_custom_call.1} parent=1 // pred_region
      %vm50 = vcmask 7168
      %51 = vst.msk [vmem:[#allocation2] sm:$0xff] %vm50, -inf
      %52 = vst.msk [vmem:[#allocation2 + $0x8] sm:$0xff] %vm50, -inf
      %53 = vst.msk [vmem:[#allocation3] sm:$0xff] %vm50, 0.0
      %54 = vst.msk [vmem:[#allocation3 + $0x8] sm:$0xff] %vm50, 0.0
      %55 = vst [vmem:[#allocation4] sm:$0xff] 0.0
      %56 = vst [vmem:[#allocation4 + $0x8] sm:$0xff] 0.0
    $region29: #{tpu_custom_call.1} parent=1 // pred_fallthru
      _
    %v57 = vld [vmem:[%s0] sm:$0xff]
    %v58 = vld [vmem:[%s0 + $0x8] sm:$0xff]
    %v59 = vmul.f32 %v57, 0.17677669
    %v60 = vmul.f32 %v58, 0.17677669
    %v61 = vld [vmem:[#allocation5] sm:$0xff]
    %v62 = vld [vmem:[#allocation5 + $0x8] sm:$0xff]
    %v63 = vld [vmem:[#allocation8] sm:$0xff]
    %v64 = vld [vmem:[#allocation8 + $0x8] sm:$0xff]
    %65 = vmatprep.subr.mxu0 0.0
    %66 = vmatpush1.xpose.msra.mxu0 %v61
    %67 = vmatprep.subr.mxu0 0.0
    %68 = vmatpush1.xpose.msra.mxu0 0.0
    %69 = vmatprep.subr.mxu0 0.0
    %70 = vmatpush1.xpose.msra.mxu0 0.0
    %71 = vmatprep.subr.mxu0 0.0
    %72 = vmatpush1.xpose.msra.mxu0 0.0
    %73 = vmatprep.subr.mxu0 0.0
    %74 = vmatpush1.xpose.msra.mxu0 0.0
    %75 = vmatprep.subr.mxu0 0.0
    %76 = vmatpush1.xpose.msra.mxu0 0.0
    %77 = vmatprep.subr.mxu0 0.0
    %78 = vmatpush1.xpose.msra.mxu0 0.0
    %79 = vmatprep.subr.mxu0 0.0
    %80 = vmatpush1.xpose.msra.mxu0 0.0
    %81 = vmatprep.subr.mxu0 0.0
    %82 = vmatpush1.xpose.msra.mxu0 0.0
    %83 = vmatprep.subr.mxu0 0.0
    %84 = vmatpush1.xpose.msra.mxu0 0.0
    %85 = vmatprep.subr.mxu0 0.0
    %86 = vmatpush1.xpose.msra.mxu0 0.0
    %87 = vmatprep.subr.mxu0 0.0
    %88 = vmatpush1.xpose.msra.mxu0 0.0
    %89 = vmatprep.subr.mxu0 0.0
    %90 = vmatpush1.xpose.msra.mxu0 0.0
    %91 = vmatprep.subr.mxu0 0.0
    %92 = vmatpush1.xpose.msra.mxu0 0.0
    %93 = vmatprep.subr.mxu0 0.0
    %94 = vmatpush1.xpose.msra.mxu0 0.0
    %95 = vmatprep.subr.mxu0 0.0
    %96 = vmatpush1.xpose.msra.mxu0 0.0
    %97 = vmatprep.subr.mxu0 0.0
    %98 = vmatpush1.xpose.msra.mxu0 0.0
    %99 = vmatprep.subr.mxu0 0.0
    %100 = vmatpush1.xpose.msra.mxu0 0.0
    %101 = vmatprep.subr.mxu0 0.0
    %102 = vmatpush1.xpose.msra.mxu0 0.0
    %103 = vmatprep.subr.mxu0 0.0
    %104 = vmatpush1.xpose.msra.mxu0 0.0
    %105 = vmatprep.subr.mxu0 0.0
    %106 = vmatpush1.xpose.msra.mxu0 0.0
    %107 = vmatprep.subr.mxu0 0.0
    %108 = vmatpush1.xpose.msra.mxu0 0.0
    %109 = vmatprep.subr.mxu0 0.0
    %110 = vmatpush1.xpose.msra.mxu0 0.0
    %111 = vmatprep.subr.mxu0 0.0
    %112 = vmatpush1.xpose.msra.mxu0 0.0
    %113 = vmatprep.subr.mxu0 0.0
    %114 = vmatpush1.xpose.msra.mxu0 0.0
    %115 = vmatprep.subr.mxu0 0.0
    %116 = vmatpush1.xpose.msra.mxu0 0.0
    %117 = vmatprep.subr.mxu0 0.0
    %118 = vmatpush1.xpose.msra.mxu0 0.0
    %119 = vmatprep.subr.mxu0 0.0
    %120 = vmatpush1.xpose.msra.mxu0 0.0
    %121 = vmatprep.subr.mxu0 0.0
    %122 = vmatpush1.xpose.msra.mxu0 0.0
    %123 = vmatprep.subr.mxu0 0.0
    %124 = vmatpush1.xpose.msra.mxu0 0.0
    %125 = vmatprep.subr.mxu0 0.0
    %126 = vmatpush1.xpose.msra.mxu0 0.0
    %127 = vmatprep.subr.mxu0 0.0
    %128 = vmatpush1.xpose.msra.mxu0 0.0
    %129 = vmatprep.mubr.f32.mxu0 0.0
    %130 = vmatmul.mubr.f32.gmra.mrb[0].mxu0 %v59
    %v131 = vpop.f32.mrb[0].mxu0
    %v132 = vadd.f32 0.0, %v131
    %v133 = vpop.f32.mrb[0].mxu0
    %134 = vdwg.mxu0
    %135 = vmatprep.subr.mxu0 0.0
    %136 = vmatpush1.xpose.msra.mxu0 %v62
    %137 = vmatprep.subr.mxu0 0.0
    %138 = vmatpush1.xpose.msra.mxu0 0.0
    %139 = vmatprep.subr.mxu0 0.0
    %140 = vmatpush1.xpose.msra.mxu0 0.0
    %141 = vmatprep.subr.mxu0 0.0
    %142 = vmatpush1.xpose.msra.mxu0 0.0
    %143 = vmatprep.subr.mxu0 0.0
    %144 = vmatpush1.xpose.msra.mxu0 0.0
    %145 = vmatprep.subr.mxu0 0.0
    %146 = vmatpush1.xpose.msra.mxu0 0.0
    %147 = vmatprep.subr.mxu0 0.0
    %148 = vmatpush1.xpose.msra.mxu0 0.0
    %149 = vmatprep.subr.mxu0 0.0
    %150 = vmatpush1.xpose.msra.mxu0 0.0
    %151 = vmatprep.subr.mxu0 0.0
    %152 = vmatpush1.xpose.msra.mxu0 0.0
    %153 = vmatprep.subr.mxu0 0.0
    %154 = vmatpush1.xpose.msra.mxu0 0.0
    %155 = vmatprep.subr.mxu0 0.0
    %156 = vmatpush1.xpose.msra.mxu0 0.0
    %157 = vmatprep.subr.mxu0 0.0
    %158 = vmatpush1.xpose.msra.mxu0 0.0
    %159 = vmatprep.subr.mxu0 0.0
    %160 = vmatpush1.xpose.msra.mxu0 0.0
    %161 = vmatprep.subr.mxu0 0.0
    %162 = vmatpush1.xpose.msra.mxu0 0.0
    %163 = vmatprep.subr.mxu0 0.0
    %164 = vmatpush1.xpose.msra.mxu0 0.0
    %165 = vmatprep.subr.mxu0 0.0
    %166 = vmatpush1.xpose.msra.mxu0 0.0
    %167 = vmatprep.subr.mxu0 0.0
    %168 = vmatpush1.xpose.msra.mxu0 0.0
    %169 = vmatprep.subr.mxu0 0.0
    %170 = vmatpush1.xpose.msra.mxu0 0.0
    %171 = vmatprep.subr.mxu0 0.0
    %172 = vmatpush1.xpose.msra.mxu0 0.0
    %173 = vmatprep.subr.mxu0 0.0
    %174 = vmatpush1.xpose.msra.mxu0 0.0
    %175 = vmatprep.subr.mxu0 0.0
    %176 = vmatpush1.xpose.msra.mxu0 0.0
    %177 = vmatprep.subr.mxu0 0.0
    %178 = vmatpush1.xpose.msra.mxu0 0.0
    %179 = vmatprep.subr.mxu0 0.0
    %180 = vmatpush1.xpose.msra.mxu0 0.0
    %181 = vmatprep.subr.mxu0 0.0
    %182 = vmatpush1.xpose.msra.mxu0 0.0
    %183 = vmatprep.subr.mxu0 0.0
    %184 = vmatpush1.xpose.msra.mxu0 0.0
    %185 = vmatprep.subr.mxu0 0.0
    %186 = vmatpush1.xpose.msra.mxu0 0.0
    %187 = vmatprep.subr.mxu0 0.0
    %188 = vmatpush1.xpose.msra.mxu0 0.0
    %189 = vmatprep.subr.mxu0 0.0
    %190 = vmatpush1.xpose.msra.mxu0 0.0
    %191 = vmatprep.subr.mxu0 0.0
    %192 = vmatpush1.xpose.msra.mxu0 0.0
    %193 = vmatprep.subr.mxu0 0.0
    %194 = vmatpush1.xpose.msra.mxu0 0.0
    %195 = vmatprep.subr.mxu0 0.0
    %196 = vmatpush1.xpose.msra.mxu0 0.0
    %197 = vmatprep.subr.mxu0 0.0
    %198 = vmatpush1.xpose.msra.mxu0 0.0
    %199 = vmatprep.mubr.f32.mxu0 0.0
    %200 = vmatmul.mubr.f32.gmra.mrb[0].mxu0 %v60
    %v201 = vpop.f32.mrb[0].mxu0
    %v202 = vadd.f32 0.0, %v201
    %v203 = vpop.f32.mrb[0].mxu0
    %204 = vdwg.mxu0
    %s205 = smul.u32 0, 8
    %v206 = vlaneseq
    %v207 = vand.u32 %v206, 127
    %v208 = vstv %s205
    %v209 = vadd.s32 %v208, %v207
    %v210 = vld [vmem:[%s3] sm:$0xff]
    %v211 = vld [vmem:[%s3 + $0x8] sm:$0xff]
    %212 = vset.pattern.permute.xlu0 0
    %213 = vperm.xlu0 %212, %v210
    %v214 = vpop.permute.xlu0 %213
    %215 = vset.pattern.permute.xlu0 0
    %216 = vperm.xlu0 %215, %v211
    %v217 = vpop.permute.xlu0 %216
    %vm218 = vcmp.lt.s32.totalorder %v209, %v214
    %vm219 = vcmp.lt.s32.totalorder %v209, %v217
    %v220 = vsel %vm218, %v132, -1000000.0
    %v221 = vsel %vm219, %v202, -1000000.0
    %v222 = vld [vmem:[#allocation2] sm:$0xff]
    %v223 = vld [vmem:[#allocation2 + $0x8] sm:$0xff]
    %vm224 = vcmask 64512
    %v225 = vsel %vm224, %v220, -inf
    %226 = vmax.xlane.f32.xlu0 %v225
    %v227 = vpop.xlane.xlu0 %226
    %v228 = vsel %vm224, %v221, -inf
    %229 = vmax.xlane.f32.xlu0 %v228
    %v230 = vpop.xlane.xlu0 %229
    %v231 = vmax.f32 %v222, %v227
    %v232 = vmax.f32 %v223, %v230
    %v233 = vsub.f32 %v222, %v231
    %v234 = vsub.f32 %v223, %v232
    %v235 = vmul.f32 %v233, 1.442695
    %v236 = vpow.pop %v235
    %v237 = vmul.f32 %v234, 1.442695
    %v238 = vpow.pop %v237
    %240 = vset.pattern.permute.xlu0 0
    %241 = vperm.xlu0 %240, %v231
    %v242 = vpop.permute.xlu0 %241
    %245 = vset.pattern.permute.xlu0 0
    %246 = vperm.xlu0 %245, %v232
    %v247 = vpop.permute.xlu0 %246
    %v249 = vsub.f32 %v220, %v242
    %v250 = vsub.f32 %v221, %v247
    %v251 = vmul.f32 %v249, 1.442695
    %v252 = vpow.pop %v251
    %v253 = vmul.f32 %v250, 1.442695
    %v254 = vpow.pop %v253
    %v255 = vld [vmem:[#allocation3] sm:$0xff]
    %v256 = vld [vmem:[#allocation3 + $0x8] sm:$0xff]
    %v257 = vmul.f32 %v236, %v255
    %v258 = vmul.f32 %v238, %v256
    %v259 = vsel %vm224, %v252, 0.0
    %260 = vadd.xlane.f32.xlu0 %v259
    %v261 = vpop.xlane.xlu0 %260
    %v262 = vsel %vm224, %v254, 0.0
    %263 = vadd.xlane.f32.xlu0 %v262
    %v264 = vpop.xlane.xlu0 %263
    %v265 = vadd.f32 %v257, %v261
    %v266 = vadd.f32 %v258, %v264
    %vm267 = vcmask 7168
    %268 = vst.msk [vmem:[#allocation3] sm:$0xff] %vm267, %v265
    %269 = vst.msk [vmem:[#allocation3 + $0x8] sm:$0xff] %vm267, %v266
    %v271 = vsel %vm224, %v252, 0
    %273 = vmatprep.subr.mxu0 0.0
    %274 = vmatpush1.msra.mxu0 %v63
    %275 = vmatprep.subr.mxu0 0.0
    %276 = vmatpush1.msra.mxu0 0.0
    %277 = vmatprep.subr.mxu0 0.0
    %278 = vmatpush1.msra.mxu0 0.0
    %279 = vmatprep.subr.mxu0 0.0
    %280 = vmatpush1.msra.mxu0 0.0
    %281 = vmatprep.subr.mxu0 0.0
    %282 = vmatpush1.msra.mxu0 0.0
    %283 = vmatprep.subr.mxu0 0.0
    %284 = vmatpush1.msra.mxu0 0.0
    %285 = vmatprep.subr.mxu0 0.0
    %286 = vmatpush1.msra.mxu0 0.0
    %287 = vmatprep.subr.mxu0 0.0
    %288 = vmatpush1.msra.mxu0 0.0
    %289 = vmatprep.subr.mxu0 0.0
    %290 = vmatpush1.msra.mxu0 0.0
    %291 = vmatprep.subr.mxu0 0.0
    %292 = vmatpush1.msra.mxu0 0.0
    %293 = vmatprep.subr.mxu0 0.0
    %294 = vmatpush1.msra.mxu0 0.0
    %295 = vmatprep.subr.mxu0 0.0
    %296 = vmatpush1.msra.mxu0 0.0
    %297 = vmatprep.subr.mxu0 0.0
    %298 = vmatpush1.msra.mxu0 0.0
    %299 = vmatprep.subr.mxu0 0.0
    %300 = vmatpush1.msra.mxu0 0.0
    %301 = vmatprep.subr.mxu0 0.0
    %302 = vmatpush1.msra.mxu0 0.0
    %303 = vmatprep.subr.mxu0 0.0
    %304 = vmatpush1.msra.mxu0 0.0
    %305 = vmatprep.subr.mxu0 0.0
    %306 = vmatpush1.msra.mxu0 0.0
    %307 = vmatprep.subr.mxu0 0.0
    %308 = vmatpush1.msra.mxu0 0.0
    %309 = vmatprep.subr.mxu0 0.0
    %310 = vmatpush1.msra.mxu0 0.0
    %311 = vmatprep.subr.mxu0 0.0
    %312 = vmatpush1.msra.mxu0 0.0
    %313 = vmatprep.subr.mxu0 0.0
    %314 = vmatpush1.msra.mxu0 0.0
    %315 = vmatprep.subr.mxu0 0.0
    %316 = vmatpush1.msra.mxu0 0.0
    %317 = vmatprep.subr.mxu0 0.0
    %318 = vmatpush1.msra.mxu0 0.0
    %319 = vmatprep.subr.mxu0 0.0
    %320 = vmatpush1.msra.mxu0 0.0
    %321 = vmatprep.subr.mxu0 0.0
    %322 = vmatpush1.msra.mxu0 0.0
    %323 = vmatprep.subr.mxu0 0.0
    %324 = vmatpush1.msra.mxu0 0.0
    %325 = vmatprep.subr.mxu0 0.0
    %326 = vmatpush1.msra.mxu0 0.0
    %327 = vmatprep.subr.mxu0 0.0
    %328 = vmatpush1.msra.mxu0 0.0
    %329 = vmatprep.subr.mxu0 0.0
    %330 = vmatpush1.msra.mxu0 0.0
    %331 = vmatprep.subr.mxu0 0.0
    %332 = vmatpush1.msra.mxu0 0.0
    %333 = vmatprep.subr.mxu0 0.0
    %334 = vmatpush1.msra.mxu0 0.0
    %335 = vmatprep.subr.mxu0 0.0
    %336 = vmatpush1.msra.mxu0 0.0
    %337 = vmatprep.mubr.f32.mxu0 0.0
    %338 = vmatmul.mubr.f32.gmra.mrb[0].mxu0 %v271
    %v339 = vpop.f32.mrb[0].mxu0
    %v340 = vadd.f32 0.0, %v339
    %v341 = vpop.f32.mrb[0].mxu0
    %342 = vdwg.mxu0
    %v344 = vsel %vm224, %v254, 0
    %346 = vmatprep.subr.mxu0 0.0
    %347 = vmatpush1.msra.mxu0 %v64
    %348 = vmatprep.subr.mxu0 0.0
    %349 = vmatpush1.msra.mxu0 0.0
    %350 = vmatprep.subr.mxu0 0.0
    %351 = vmatpush1.msra.mxu0 0.0
    %352 = vmatprep.subr.mxu0 0.0
    %353 = vmatpush1.msra.mxu0 0.0
    %354 = vmatprep.subr.mxu0 0.0
    %355 = vmatpush1.msra.mxu0 0.0
    %356 = vmatprep.subr.mxu0 0.0
    %357 = vmatpush1.msra.mxu0 0.0
    %358 = vmatprep.subr.mxu0 0.0
    %359 = vmatpush1.msra.mxu0 0.0
    %360 = vmatprep.subr.mxu0 0.0
    %361 = vmatpush1.msra.mxu0 0.0
    %362 = vmatprep.subr.mxu0 0.0
    %363 = vmatpush1.msra.mxu0 0.0
    %364 = vmatprep.subr.mxu0 0.0
    %365 = vmatpush1.msra.mxu0 0.0
    %366 = vmatprep.subr.mxu0 0.0
    %367 = vmatpush1.msra.mxu0 0.0
    %368 = vmatprep.subr.mxu0 0.0
    %369 = vmatpush1.msra.mxu0 0.0
    %370 = vmatprep.subr.mxu0 0.0
    %371 = vmatpush1.msra.mxu0 0.0
    %372 = vmatprep.subr.mxu0 0.0
    %373 = vmatpush1.msra.mxu0 0.0
    %374 = vmatprep.subr.mxu0 0.0
    %375 = vmatpush1.msra.mxu0 0.0
    %376 = vmatprep.subr.mxu0 0.0
    %377 = vmatpush1.msra.mxu0 0.0
    %378 = vmatprep.subr.mxu0 0.0
    %379 = vmatpush1.msra.mxu0 0.0
    %380 = vmatprep.subr.mxu0 0.0
    %381 = vmatpush1.msra.mxu0 0.0
    %382 = vmatprep.subr.mxu0 0.0
    %383 = vmatpush1.msra.mxu0 0.0
    %384 = vmatprep.subr.mxu0 0.0
    %385 = vmatpush1.msra.mxu0 0.0
    %386 = vmatprep.subr.mxu0 0.0
    %387 = vmatpush1.msra.mxu0 0.0
    %388 = vmatprep.subr.mxu0 0.0
    %389 = vmatpush1.msra.mxu0 0.0
    %390 = vmatprep.subr.mxu0 0.0
    %391 = vmatpush1.msra.mxu0 0.0
    %392 = vmatprep.subr.mxu0 0.0
    %393 = vmatpush1.msra.mxu0 0.0
    %394 = vmatprep.subr.mxu0 0.0
    %395 = vmatpush1.msra.mxu0 0.0
    %396 = vmatprep.subr.mxu0 0.0
    %397 = vmatpush1.msra.mxu0 0.0
    %398 = vmatprep.subr.mxu0 0.0
    %399 = vmatpush1.msra.mxu0 0.0
    %400 = vmatprep.subr.mxu0 0.0
    %401 = vmatpush1.msra.mxu0 0.0
    %402 = vmatprep.subr.mxu0 0.0
    %403 = vmatpush1.msra.mxu0 0.0
    %404 = vmatprep.subr.mxu0 0.0
    %405 = vmatpush1.msra.mxu0 0.0
    %406 = vmatprep.subr.mxu0 0.0
    %407 = vmatpush1.msra.mxu0 0.0
    %408 = vmatprep.subr.mxu0 0.0
    %409 = vmatpush1.msra.mxu0 0.0
    %410 = vmatprep.mubr.f32.mxu0 0.0
    %411 = vmatmul.mubr.f32.gmra.mrb[0].mxu0 %v344
    %v412 = vpop.f32.mrb[0].mxu0
    %v413 = vadd.f32 0.0, %v412
    %v414 = vpop.f32.mrb[0].mxu0
    %415 = vdwg.mxu0
    %v416 = vld [vmem:[#allocation4] sm:$0xff]
    %v417 = vld [vmem:[#allocation4 + $0x8] sm:$0xff]
    %419 = vset.pattern.permute.xlu0 0
    %420 = vperm.xlu0 %419, %v236
    %v421 = vpop.permute.xlu0 %420
    %424 = vset.pattern.permute.xlu0 0
    %425 = vperm.xlu0 %424, %v238
    %v426 = vpop.permute.xlu0 %425
    %v428 = vmul.f32 %v421, %v416
    %v429 = vmul.f32 %v426, %v417
    %v430 = vadd.f32 %v428, %v340
    %v431 = vadd.f32 %v429, %v413
    %432 = vst [vmem:[#allocation4] sm:$0xff] %v430
    %433 = vst [vmem:[#allocation4 + $0x8] sm:$0xff] %v431
    %434 = vst.msk [vmem:[#allocation2] sm:$0xff] %vm267, %v231
    %435 = vst.msk [vmem:[#allocation2 + $0x8] sm:$0xff] %vm267, %v232
    // Predicated region
    $region30: #{tpu_custom_call.1} parent=1 // pred_check
      %p436 = pneg %p46
    $region31: #{tpu_custom_call.1} parent=1 // pred_check_branch
      %438 = sbr.rel (%p436) target = $region33
    $region32: #{tpu_custom_call.1} parent=1 // pred_region
      %v439 = vld [vmem:[#allocation3] sm:$0xff]
      %v440 = vld [vmem:[#allocation3 + $0x8] sm:$0xff]
      %v441 = vrcp.pop %v439
      %v442 = vrcp.pop %v440
      %v443 = vld [vmem:[#allocation4] sm:$0xff]
      %v444 = vld [vmem:[#allocation4 + $0x8] sm:$0xff]
      %446 = vset.pattern.permute.xlu0 0
      %447 = vperm.xlu0 %446, %v441
      %v448 = vpop.permute.xlu0 %447
      %451 = vset.pattern.permute.xlu0 0
      %452 = vperm.xlu0 %451, %v442
      %v453 = vpop.permute.xlu0 %452
      %v455 = vmul.f32 %v443, %v448
      %v456 = vmul.f32 %v444, %v453
      %457 = vst [vmem:[#allocation10] sm:$0xff] %v455
      %458 = vst [vmem:[#allocation10 + $0x8] sm:$0xff] %v456
    $region33: #{tpu_custom_call.1} parent=1 // pred_fallthru
      _
    // Predicated region
    $region34: #{tpu_custom_call.1} parent=1 // pred_check
      _
    $region35: #{tpu_custom_call.1} parent=1 // pred_check_branch
      %460 = sbr.rel (0) target = $region37
    $region36: #{tpu_custom_call.1} parent=1 // pred_region
      %s462 = ssub.s32 256, 256
      %463 = vsyncadd [#allocation7], %s462
      %s464 = sshll.u32 [#allocation10], 4
      %s465 = int_to_ptr.vmem [resolvable:$true] %s464
      %470 = dma.vmem_to_hbm [thread:$0]  %s465, 256, %s4, [#allocation7], 128, 128, 8
    $region37: #{tpu_custom_call.1} parent=1 // pred_fallthru
      _
    // Predicated region
    $region38: #{tpu_custom_call.1} parent=1 // pred_check
      _
    $region39: #{tpu_custom_call.1} parent=1 // pred_check_branch
      %472 = sbr.rel (0) target = $region41
    $region40: #{tpu_custom_call.1} parent=1 // pred_region
      %473 = dma.done [#allocation7], 256
    $region41: #{tpu_custom_call.1} parent=1 // pred_fallthru
      _
    %474 = vsyncpa [#allocation6], 1
    %475 = vsyncpa [#allocation9], 1
    %476 = vsyncpa [#allocation7], 1

</llo_original>
